<compile_context>
chip_gen: v5e
topology: v5e:2x2
jax: 0.10.0
libtpu: 0.0.40
codegen_flags: <defaults>
</compile_context>

<pallas_src>
import functools

import jax
import jax.numpy as jnp
from jax.experimental import pallas as pl
from jax.experimental.pallas import tpu as pltpu

_LANES = 128


def _round_up(x, m):
    return ((x + m - 1) // m) * m


def _focal_loss_kernel(logits_ref, target_ref, at_ref, out_ref, *, gamma, gamma_int):
    # grid = (NC, tiles_per_chunk); axis 0 parallel (megacore), axis 1 arbitrary
    # (reduction).  out_ref is a (1, 128) per-chunk partial-sum accumulator that stays
    # resident in VMEM across axis 1 (all 128 lanes carry the same running sum).
    i = pl.program_id(1)

    @pl.when(i == 0)
    def _init():
        out_ref[...] = jnp.zeros_like(out_ref)

    logits = logits_ref[...]                 # (TB, C) f32
    target = target_ref[...]                 # (TB, 1) i32
    at = at_ref[...]                         # (TB, 1) f32: normalized alphas[target]
                                             # (0 on padded rows -> zero contribution)

    # Numerically-stable log-sum-exp (F.cross_entropy, reduction='none').
    m = jnp.max(logits, axis=-1, keepdims=True)                               # (TB, 1)
    lse = m + jnp.log(jnp.sum(jnp.exp(logits - m), axis=-1, keepdims=True))   # (TB, 1)

    # Gather the target logit with a where-reduce (no f32 one-hot materialization).
    col = jax.lax.broadcasted_iota(jnp.int32, logits.shape, 1)                # (TB, C)
    x_t = jnp.sum(jnp.where(col == target, logits, 0.0), axis=-1, keepdims=True)

    base = jnp.maximum(lse - x_t, 0.0)       # CE >= 0 mathematically; clamp rounding noise
    pt = jnp.exp(-base)
    one_m_pt = jnp.maximum(1.0 - pt, 0.0)    # guard pow/log against tiny negatives

    if gamma_int is not None:
        # Integer gamma (e.g. the default 2): unrolled VPU multiplies instead of
        # exp(gamma*log(x)) transcendentals.
        mod = one_m_pt
        for _ in range(gamma_int - 1):
            mod = mod * one_m_pt
    else:
        mod = one_m_pt ** gamma

    fl = at * mod * base                     # (TB, 1)
    out_ref[...] = out_ref[...] + jnp.sum(fl)


def focal_loss_multiclass(logits, target, alphas, gamma=2.0, *, tile_rows=None):
    """Multiclass focal loss, reduction='mean'.

    logits: (B, C) float, target: (B,) int, alphas: (C,) float.
    """
    if gamma < 1:
        raise RuntimeError("gamma must be >= 1 (see reference implementation)")
    B, C = logits.shape

    logits = logits.astype(jnp.float32)
    alphas = jnp.asarray(alphas, jnp.float32)
    alphas = alphas / jnp.sum(alphas)            # alphas.div_(alphas.sum()), hoisted
    tgt = target.astype(jnp.int32)
    at = alphas[tgt]                             # tiny O(B) gather, done once in XLA

    # Batch tile size: keep each logits tile <= ~8 MiB so the double-buffered pipeline
    # fits comfortably in VMEM on v5e/v6e (128 MiB) and v7x (64 MiB).
    if tile_rows is None:
        tb = min(512, max(8, (8 * 1024 * 1024) // max(1, C * 4)))
    else:
        tb = int(tile_rows)
    tb = max(8, (tb // 8) * 8)
    tb = min(tb, _round_up(B, 8))

    # Leading 'parallel' axis of size 2 splits the batch across the two v7x TensorCores
    # (no effect on single-TC v5e/v6e; skipped when there is only one tile of work).
    nc = 2 if (B + tb - 1) // tb >= 2 else 1
    bp = _round_up(B, nc * tb)
    pad = bp - B

    logits_p = jnp.pad(logits, ((0, pad), (0, 0)))
    tgt_p = jnp.pad(tgt, (0, pad)).reshape(bp, 1)
    at_p = jnp.pad(at, (0, pad)).reshape(bp, 1)  # alpha = 0 on padded rows

    tiles_per_chunk = bp // (nc * tb)

    gamma_f = float(gamma)
    gamma_int = int(gamma_f) if float(gamma_f).is_integer() else None
    kernel = functools.partial(_focal_loss_kernel, gamma=gamma_f, gamma_int=gamma_int)

    partials = pl.pallas_call(
        kernel,
        out_shape=jax.ShapeDtypeStruct((1, nc * _LANES), jnp.float32),
        grid_spec=pltpu.PrefetchScalarGridSpec(
            num_scalar_prefetch=0,
            grid=(nc, tiles_per_chunk),
            in_specs=[
                pl.BlockSpec((tb, C), lambda c, i: (c * tiles_per_chunk + i, 0)),
                pl.BlockSpec((tb, 1), lambda c, i: (c * tiles_per_chunk + i, 0)),
                pl.BlockSpec((tb, 1), lambda c, i: (c * tiles_per_chunk + i, 0)),
            ],
            out_specs=pl.BlockSpec((1, _LANES), lambda c, i: (0, c)),
        ),
        compiler_params=pltpu.CompilerParams(
            dimension_semantics=("parallel", "arbitrary"),
            vmem_limit_bytes=48 * 1024 * 1024,
        ),
    )(logits_p, tgt_p, at_p)

    # Each chunk's (1, 128) block carries its partial sum replicated across lanes.
    chunk_sums = partials.reshape(nc, _LANES)[:, 0]
    return jnp.sum(chunk_sums) / jnp.float32(B)   # reduction='mean'


def _reference(logits, target, alphas, gamma):
    alphas = jnp.asarray(alphas, jnp.float32)
    alphas = alphas / jnp.sum(alphas)
    logp = jax.nn.log_softmax(logits.astype(jnp.float32), axis=-1)
    base = -jnp.take_along_axis(logp, target[:, None], axis=-1)[:, 0]
    at = alphas[target]
    pt = jnp.exp(-base)
    return jnp.mean(at * (1.0 - pt) ** gamma * base)


if __name__ == "__main__":
    # Deterministic synthetic inputs (multiclass: input BxC, target B).
    B, C = 8, 16
    key = jax.random.PRNGKey(0)
    k1, k2 = jax.random.split(key)
    logits = jax.random.normal(k1, (B, C), dtype=jnp.float32)
    target = jax.random.randint(k2, (B,), 0, C, dtype=jnp.int32)
    # Deterministic per-class alpha weights (module __init__ arg `alphas`).
    alphas = jnp.arange(1, C + 1, dtype=jnp.float32)
    gamma = 2.0

    loss = focal_loss_multiclass(logits, target, alphas, gamma=gamma)
    jax.block_until_ready(loss)
    ref = _reference(logits, target, alphas, gamma)
    assert jnp.allclose(loss, ref, rtol=1e-5, atol=1e-5), (loss, ref)

    # Exercise the tiled / two-chunk accumulator path (grid > 1, batch padding,
    # non-integer gamma -> pow path) with a forced small tile.
    B2, C2 = 37, 24
    k3, k4 = jax.random.split(k2)
    logits2 = jax.random.normal(k3, (B2, C2), dtype=jnp.float32)
    target2 = jax.random.randint(k4, (B2,), 0, C2, dtype=jnp.int32)
    alphas2 = jnp.ones((C2,), dtype=jnp.float32)
    loss2 = focal_loss_multiclass(logits2, target2, alphas2, gamma=2.5, tile_rows=8)
    jax.block_until_ready(loss2)
    ref2 = _reference(logits2, target2, alphas2, 2.5)
    assert jnp.allclose(loss2, ref2, rtol=1e-5, atol=1e-5), (loss2, ref2)

    # TODO(synk): 'binary' / 'multilabel' fl_types (BCE-with-logits path) and
    # reduction='none'/'sum' are not kernelized; only multiclass + 'mean' is.
    print("KERNEL_OK")
</pallas_src>

<mosaic_0001>
module attributes {stable_mosaic.version = 11 : i64} {
  func.func @_focal_loss_kernel(%arg0: i32, %arg1: i32, %arg2: memref<8x16xf32, #tpu.memory_space<vmem>>, %arg3: memref<8x1xi32, #tpu.memory_space<vmem>>, %arg4: memref<8x1xf32, #tpu.memory_space<vmem>>, %arg5: memref<1x128xf32, #tpu.memory_space<vmem>>) attributes {dimension_semantics = [#tpu.dimension_semantics<parallel>, #tpu.dimension_semantics<arbitrary>], iteration_bounds = array<i64: 1, 1>, scalar_prefetch = 0 : i64, scratch_operands = 0 : i64, tpu.core_type = #tpu.core_type<tc>, window_params = [{transform_indices = @transform_0, window_bounds = array<i64: 8, 16>}, {transform_indices = @transform_1, window_bounds = array<i64: 8, 1>}, {transform_indices = @transform_2, window_bounds = array<i64: 8, 1>}, {transform_indices = @transform_3, window_bounds = array<i64: 1, 128>}]} {
    %c0_i32 = arith.constant 0 : i32
    %0 = arith.cmpi eq, %arg1, %c0_i32 : i32
    %1 = arith.extui %0 : i1 to i32
    %c0_i32_0 = arith.constant 0 : i32
    %2 = arith.cmpi ne, %1, %c0_i32_0 : i32
    scf.if %2 {
      %cst_18 = arith.constant 0.000000e+00 : f32
      %43 = vector.broadcast %cst_18 : f32 to vector<1x128xf32>
      %c0_19 = arith.constant 0 : index
      %c0_20 = arith.constant 0 : index
      %44 = vector.load %arg5[%c0_19, %c0_20] : memref<1x128xf32, #tpu.memory_space<vmem>>, vector<1x128xf32>
      tpu.vector_store %arg5[%c0_19, %c0_20], %43 {strides = array<i32>} : memref<1x128xf32, #tpu.memory_space<vmem>>, vector<1x128xf32>,
    } else {
    }
    %c0 = arith.constant 0 : index
    %c0_1 = arith.constant 0 : index
    %3 = vector.load %arg2[%c0, %c0_1] : memref<8x16xf32, #tpu.memory_space<vmem>>, vector<8x16xf32>
    %c0_2 = arith.constant 0 : index
    %c0_3 = arith.constant 0 : index
    %4 = vector.load %arg3[%c0_2, %c0_3] : memref<8x1xi32, #tpu.memory_space<vmem>>, vector<8x1xi32>
    %c0_4 = arith.constant 0 : index
    %c0_5 = arith.constant 0 : index
    %5 = vector.load %arg4[%c0_4, %c0_5] : memref<8x1xf32, #tpu.memory_space<vmem>>, vector<8x1xf32>
    %cst = arith.constant dense<0xFF800000> : vector<8xf32>
    %6 = vector.multi_reduction <maximumf>, %3, %cst [1] : vector<8x16xf32> to vector<8xf32>
    %7 = vector.shape_cast %6 : vector<8xf32> to vector<8x1xf32>
    %8 = vector.broadcast %7 : vector<8x1xf32> to vector<8x16xf32>
    %9 = arith.subf %3, %8 : vector<8x16xf32>
    %10 = math.exp %9 : vector<8x16xf32>
    %cst_6 = arith.constant dense<0.000000e+00> : vector<8xf32>
    %11 = vector.multi_reduction <add>, %10, %cst_6 [1] : vector<8x16xf32> to vector<8xf32>
    %12 = vector.shape_cast %11 : vector<8xf32> to vector<8x1xf32>
    %13 = math.log %12 : vector<8x1xf32>
    %14 = arith.addf %7, %13 : vector<8x1xf32>
    %15 = tpu.iota {dimensions = array<i32: 1>} : vector<8x16xi32>
    %16 = vector.broadcast %4 : vector<8x1xi32> to vector<8x16xi32>
    %17 = arith.cmpi eq, %15, %16 : vector<8x16xi32>
    %cst_7 = arith.constant 0.000000e+00 : f32
    %18 = vector.broadcast %cst_7 : f32 to vector<8x16xf32>
    %19 = arith.select %17, %3, %18 : vector<8x16xi1>, vector<8x16xf32>
    %cst_8 = arith.constant dense<0.000000e+00> : vector<8xf32>
    %20 = vector.multi_reduction <add>, %19, %cst_8 [1] : vector<8x16xf32> to vector<8xf32>
    %21 = vector.shape_cast %20 : vector<8xf32> to vector<8x1xf32>
    %22 = arith.subf %14, %21 : vector<8x1xf32>
    %cst_9 = arith.constant 0.000000e+00 : f32
    %23 = vector.broadcast %cst_9 : f32 to vector<8x1xf32>
    %24 = arith.maximumf %22, %23 : vector<8x1xf32>
    %cst_10 = arith.constant 0.000000e+00 : f32
    %25 = vector.broadcast %cst_10 : f32 to vector<8x1xf32>
    %26 = arith.subf %25, %24 : vector<8x1xf32>
    %27 = math.exp %26 : vector<8x1xf32>
    %cst_11 = arith.constant 1.000000e+00 : f32
    %28 = vector.broadcast %cst_11 : f32 to vector<8x1xf32>
    %29 = arith.subf %28, %27 : vector<8x1xf32>
    %cst_12 = arith.constant 0.000000e+00 : f32
    %30 = vector.broadcast %cst_12 : f32 to vector<8x1xf32>
    %31 = arith.maximumf %29, %30 : vector<8x1xf32>
    %32 = arith.mulf %31, %31 : vector<8x1xf32>
    %33 = arith.mulf %5, %32 : vector<8x1xf32>
    %34 = arith.mulf %33, %24 : vector<8x1xf32>
    %c0_13 = arith.constant 0 : index
    %c0_14 = arith.constant 0 : index
    %35 = vector.load %arg5[%c0_13, %c0_14] : memref<1x128xf32, #tpu.memory_space<vmem>>, vector<1x128xf32>
    %36 = vector.shape_cast %34 : vector<8x1xf32> to vector<1x8x1xf32>
    %cst_15 = arith.constant dense<0.000000e+00> : vector<1xf32>
    %37 = vector.multi_reduction <add>, %36, %cst_15 [1, 2] : vector<1x8x1xf32> to vector<1xf32>
    %38 = vector.shape_cast %37 : vector<1xf32> to vector<1x1x1xf32>
    %39 = vector.extract %38[0, 0, 0] : f32 from vector<1x1x1xf32>
    %40 = vector.broadcast %39 : f32 to vector<1x128xf32>
    %41 = arith.addf %35, %40 : vector<1x128xf32>
    %c0_16 = arith.constant 0 : index
    %c0_17 = arith.constant 0 : index
    %42 = vector.load %arg5[%c0_16, %c0_17] : memref<1x128xf32, #tpu.memory_space<vmem>>, vector<1x128xf32>
    tpu.vector_store %arg5[%c0_16, %c0_17], %41 {strides = array<i32>} : memref<1x128xf32, #tpu.memory_space<vmem>>, vector<1x128xf32>,
    return
  }
  func.func @transform_0(%arg0: i32, %arg1: i32) -> (i32, i32) {
    %c1_i32 = arith.constant 1 : i32
    %0 = arith.muli %arg0, %c1_i32 : i32
    %1 = arith.addi %0, %arg1 : i32
    %c0_i32 = arith.constant 0 : i32
    %c0_i32_0 = arith.constant 0 : i32
    return %1, %c0_i32 : i32, i32
  }
  func.func @transform_1(%arg0: i32, %arg1: i32) -> (i32, i32) {
    %c1_i32 = arith.constant 1 : i32
    %0 = arith.muli %arg0, %c1_i32 : i32
    %1 = arith.addi %0, %arg1 : i32
    %c0_i32 = arith.constant 0 : i32
    %c0_i32_0 = arith.constant 0 : i32
    return %1, %c0_i32 : i32, i32
  }
  func.func @transform_2(%arg0: i32, %arg1: i32) -> (i32, i32) {
    %c1_i32 = arith.constant 1 : i32
    %0 = arith.muli %arg0, %c1_i32 : i32
    %1 = arith.addi %0, %arg1 : i32
    %c0_i32 = arith.constant 0 : i32
    %c0_i32_0 = arith.constant 0 : i32
    return %1, %c0_i32 : i32, i32
  }
  func.func @transform_3(%arg0: i32, %arg1: i32) -> (i32, i32) {
    %c0_i32 = arith.constant 0 : i32
    %c0_i32_0 = arith.constant 0 : i32
    return %c0_i32, %arg0 : i32, i32
  }
}

</mosaic_0001>

<llo_original>
// kernel: tpu_custom_call.1
$region0: #{tpu_custom_call.1}
  #allocation0 [shape = 'u32[]', space=smem, size = 0x4, offset = 0x4, fixed_abs, tag = 'smem constant byte address 0x4 - core index']
  #allocation1 [shape = 'u32[72,128]{1,0:T(1,128)}', space=vmem, size = 0x9000, scoped, tag = 'internal scratch']
  %s0 = inlined_call_operand.vmem [shape: f32[8,16], index: 0, kind: input, shape index: {}]
  %s1 = inlined_call_operand.vmem [shape: s32[8,1], index: 1, kind: input, shape index: {}]
  %s2 = inlined_call_operand.vmem [shape: f32[8,1], index: 2, kind: input, shape index: {}]
  %s3 = inlined_call_operand.hbm [shape: f32[1,128], index: 3, kind: output, shape index: {}]
  %s4 = sld [smem:[#allocation0]]
  $region26: #{tpu_custom_call.1} parent=0
    _
  %s6 = ssub.s32 1, %s4
  %s7 = scalar_select 0, %s6, %s4
  $region1: #{tpu_custom_call.1} parent=0
    #allocation2 [shape = 'u8[512]{0}', space=vmem, size = 0x400, scoped, tag = 'output window, operand 0, single buffered']
    #allocation3 [shape = 's32[1]{0}', space=sflag, size = 0x4, scoped, tag = 'scoped memory for tpu_custom_call.1']
    %8 = vsyncpa [#allocation3], 0
    // Predicated region
    $region2: #{tpu_custom_call.1} parent=1 // pred_check
      _
    $region3: #{tpu_custom_call.1} parent=1 // pred_check_branch
      %10 = sbr.rel (0) target = $region5
    $region4: #{tpu_custom_call.1} parent=1 // pred_region
      %s11 = sadd.s32 0, 0
      %p12 = scmp.lt.s32.totalorder %s11, 0
      %s13 = scalar_select %p12, %s11, 0
      %s14 = smul.addr %s13, 8
      %s15 = scalar_lea.vmem %s0, %s14
      %s16 = sadd.s32 0, 0
    $region5: #{tpu_custom_call.1} parent=1 // pred_fallthru
      _
    // Predicated region
    $region6: #{tpu_custom_call.1} parent=1 // pred_check
      _
    $region7: #{tpu_custom_call.1} parent=1 // pred_check_branch
      %18 = sbr.rel (0) target = $region9
    $region8: #{tpu_custom_call.1} parent=1 // pred_region
      %s19 = sadd.s32 0, 0
      %p20 = scmp.lt.s32.totalorder %s19, 0
      %s21 = scalar_select %p20, %s19, 0
      %s22 = smul.addr %s21, 8
      %s23 = scalar_lea.vmem %s1, %s22
      %s24 = sadd.s32 0, 0
    $region9: #{tpu_custom_call.1} parent=1 // pred_fallthru
      _
    // Predicated region
    $region10: #{tpu_custom_call.1} parent=1 // pred_check
      _
    $region11: #{tpu_custom_call.1} parent=1 // pred_check_branch
      %26 = sbr.rel (0) target = $region13
    $region12: #{tpu_custom_call.1} parent=1 // pred_region
      %s27 = sadd.s32 0, 0
      %p28 = scmp.lt.s32.totalorder %s27, 0
      %s29 = scalar_select %p28, %s27, 0
      %s30 = smul.addr %s29, 8
      %s31 = scalar_lea.vmem %s2, %s30
      %s32 = sadd.s32 0, 0
    $region13: #{tpu_custom_call.1} parent=1 // pred_fallthru
      _
    %s33 = sadd.s32 0, 0
    %p34 = scmp.lt.s32.totalorder %s33, 0
    %s35 = scalar_select %p34, %s33, 0
    %s36 = smul.addr %s35, 8
    %s37 = scalar_lea.vmem %s0, %s36
    %s38 = sadd.s32 0, 0
    %p39 = scmp.lt.s32.totalorder %s38, 0
    %s40 = scalar_select %p39, %s38, 0
    %s41 = smul.addr %s40, 8
    %s42 = scalar_lea.vmem %s1, %s41
    %s43 = sadd.s32 0, 0
    %p44 = scmp.lt.s32.totalorder %s43, 0
    %s45 = scalar_select %p44, %s43, 0
    %s46 = smul.addr %s45, 8
    %s47 = scalar_lea.vmem %s2, %s46
    %s48 = sadd.s32 0, 0
    %p49 = scmp.lt.s32.totalorder %s48, 0
    %s50 = scalar_select %p49, %s48, 0
    %s51 = smul.addr %s50, 8
    %s52 = scalar_lea.vmem %s0, %s51
    %s53 = sadd.s32 0, 0
    %s54 = sadd.s32 0, 0
    %p55 = scmp.lt.s32.totalorder %s54, 0
    %s56 = scalar_select %p55, %s54, 0
    %s57 = smul.addr %s56, 8
    %s58 = scalar_lea.vmem %s1, %s57
    %s59 = sadd.s32 0, 0
    %s60 = sadd.s32 0, 0
    %p61 = scmp.lt.s32.totalorder %s60, 0
    %s62 = scalar_select %p61, %s60, 0
    %s63 = smul.addr %s62, 8
    %s64 = scalar_lea.vmem %s2, %s63
    %s65 = sadd.s32 0, 0
    %p66 = scmp.eq.s32.totalorder 0, 0
    // Predicated region
    $region14: #{tpu_custom_call.1} parent=1 // pred_check
      %p67 = pneg %p66
    $region15: #{tpu_custom_call.1} parent=1 // pred_check_branch
      %69 = sbr.rel (%p67) target = $region17
    $region16: #{tpu_custom_call.1} parent=1 // pred_region
      %70 = vst [vmem:[#allocation2] sm:$0x1] 0.0
    $region17: #{tpu_custom_call.1} parent=1 // pred_fallthru
      _
    %v71 = vld [vmem:[%s52] sm:$0xff]
    %v72 = vld [vmem:[%s58] sm:$0xff]
    %v73 = vld [vmem:[%s64] sm:$0xff]
    %vm74 = vcmask 130048
    %v75 = vsel %vm74, %v71, -inf
    %76 = vmax.xlane.f32.xlu0 %v75
    %v77 = vpop.xlane.xlu0 %76
    %v78 = vsub.f32 %v71, %v77
    %v79 = vmul.f32 %v78, 1.442695
    %v80 = vpow.pop %v79
    %v81 = vsel %vm74, %v80, 0.0
    %82 = vadd.xlane.f32.xlu0 %v81
    %v83 = vpop.xlane.xlu0 %82
    %v84 = vlog2.pop %v83
    %v85 = vmul.f32 %v84, 0.6931472
    %v86 = vadd.f32 %v77, %v85
    %v87 = vlaneseq
    %v88 = vand.u32 %v87, 127
    %89 = vset.pattern.permute.xlu0 0
    %90 = vperm.xlu0 %89, %v72
    %v91 = vpop.permute.xlu0 %90
    %vm92 = vcmp.eq.s32.totalorder %v88, %v91
    %v93 = vsel %vm92, %v71, 0.0
    %v94 = vsel %vm74, %v93, 0.0
    %95 = vadd.xlane.f32.xlu0 %v94
    %v96 = vpop.xlane.xlu0 %95
    %v97 = vsub.f32 %v86, %v96
    %v98 = vmax.f32 %v97, 0.0
    %v99 = vsub.f32 0.0, %v98
    %v100 = vmul.f32 %v99, 1.442695
    %v101 = vpow.pop %v100
    %v102 = vsub.f32 1.0, %v101
    %v103 = vmax.f32 %v102, 0.0
    %v104 = vmul.f32 %v103, %v103
    %v105 = vmul.f32 %v73, %v104
    %v106 = vmul.f32 %v105, %v98
    %v107 = vld [vmem:[#allocation2] sm:$0x1]
    %vm108 = vcmask 7168
    %v109 = vsel %vm108, %v106, 0.0
    %110 = vadd.xlane.f32.xlu0 %v109
    %v111 = vpop.xlane.xlu0 %110
    %v112 = vrot.slane %v111, 4
    %v113 = vadd.f32 %v111, %v112
    %v114 = vrot.slane %v113, 2
    %v115 = vadd.f32 %v113, %v114
    %v116 = vrot.slane %v115, 1
    %v117 = vadd.f32 %v115, %v116
    %s118 = vtos %v117
    %v119 = vstv %s118
    %v120 = vadd.f32 %v107, %v119
    %121 = vst [vmem:[#allocation2] sm:$0x1] %v120
    // Predicated region
    $region18: #{tpu_custom_call.1} parent=1 // pred_check
      _
    $region19: #{tpu_custom_call.1} parent=1 // pred_check_branch
      %123 = sbr.rel (0) target = $region21
    $region20: #{tpu_custom_call.1} parent=1 // pred_region
      %125 = vsyncadd [#allocation3], 0
      %s127 = sshll.u32 [#allocation2], 4
      %s128 = int_to_ptr.vmem [resolvable:$true] %s127
      %s129 = sshll.u32 %s3, 4
      %s130 = int_to_ptr.hbm [resolvable:$true] %s129
      %132 = dma.vmem_to_hbm [thread:$0]  %s128, 16, %s130, [#allocation3]
    $region21: #{tpu_custom_call.1} parent=1 // pred_fallthru
      _
    // Predicated region
    $region22: #{tpu_custom_call.1} parent=1 // pred_check
      _
    $region23: #{tpu_custom_call.1} parent=1 // pred_check_branch
      %134 = sbr.rel (0) target = $region25
    $region24: #{tpu_custom_call.1} parent=1 // pred_region
      %136 = dma.done [#allocation3], 16
    $region25: #{tpu_custom_call.1} parent=1 // pred_fallthru
      _
    %137 = vsyncpa [#allocation3], 1

</llo_original>
